<compile_context>
chip_gen: v5e
topology: v5e:2x2
jax: 0.10.0
libtpu: 0.0.40
codegen_flags: <defaults>
</compile_context>

<pallas_src>
import functools
import math

import jax
import jax.numpy as jnp
from jax import lax
from jax.experimental import pallas as pl
from jax.experimental.pallas import tpu as pltpu

_LANE = 128


def _round_up(x, m):
    return ((x + m - 1) // m) * m


def _padded_bytes(shape, dtype):
    """VMEM footprint of an array with (sublane, lane) layout padding."""
    itemsize = jnp.dtype(dtype).itemsize
    sub = max(8, 32 // itemsize)  # f32: 8, bf16: 16, int8: 32 sublanes per tile
    if len(shape) == 1:
        lead, rows, cols = 1, 1, shape[0]
    else:
        rows, cols = shape[-2], shape[-1]
        lead = 1
        for d in shape[:-2]:
            lead *= d
    return lead * _round_up(rows, sub) * _round_up(cols, _LANE) * itemsize


def _vmem_capacity_bytes():
    try:
        return int(pltpu.get_tpu_info().vmem_capacity_bytes)
    except Exception:  # fall back to the v5e/v6e physical size
        return 128 * 1024 * 1024


def _per_step_vmem(bb, t_enc, t_dec, e, hp, act_dtype, has_mask):
    f32 = jnp.float32
    # DMA'd tiles: double-buffered by the BlockSpec pipeline.
    dma = (
        _padded_bytes((bb * t_enc, e), act_dtype)        # x_encode tile
        + _padded_bytes((bb * t_dec, e), act_dtype)      # x_decode tile
        + _padded_bytes((bb * t_dec, hp), f32)           # output tile
        + _padded_bytes((e, 2 * hp), act_dtype)          # fused W_kv^T
        + _padded_bytes((e, hp), act_dtype)              # scaled W_q^T
    )
    if has_mask:
        dma += _padded_bytes((bb, t_dec, t_enc), jnp.int8)
    dma *= 2
    # In-kernel intermediates: single-buffered values.
    inter = (
        _padded_bytes((bb * t_enc, 2 * hp), f32)         # kv (f32 accumulate)
        + _padded_bytes((bb * t_dec, hp), f32)           # q
        + _padded_bytes((bb, t_enc, hp), act_dtype)      # k/v operand casts
        + 2 * _padded_bytes((bb, t_dec, t_enc), f32)     # logits + probs
        + _padded_bytes((bb * t_dec, hp), f32)           # out before final cast
    )
    return dma + inter


def _pick_batch_block(B, t_enc, t_dec, e, hp, act_dtype, has_mask, budget):
    """Largest legal batch block whose padded per-step working set fits `budget`.

    Capped at B//2 so the grid has >= 2 steps and both v7x TensorCores can be
    fed along the "parallel" axis (a second grid step is ~free on v5e/v6e).
    """
    max_bb = max(1, B // 2) if B > 1 else 1
    legal = [
        bb for bb in range(1, max_bb + 1)
        if B % bb == 0 and (bb * t_enc) % 8 == 0 and (bb * t_dec) % 8 == 0
    ]
    if not legal:
        return B  # full-array blocks are always layout-legal
    fitting = [bb for bb in legal
               if _per_step_vmem(bb, t_enc, t_dec, e, hp, act_dtype, has_mask)
               <= budget]
    return max(fitting) if fitting else min(legal)


def _xattn_kernel(*refs, bb, t_enc, t_dec, hp, has_mask, mm_dtype):
    if has_mask:
        xe_ref, xd_ref, mask_ref, wkv_ref, wq_ref, o_ref = refs
    else:
        xe_ref, xd_ref, wkv_ref, wq_ref, o_ref = refs
        mask_ref = None

    # Fused K|V projection: one MXU pass with N = 2*hp; the split at lane hp
    # (a multiple of 128) is a free lane-aligned slice.  Operands are already
    # in the MXU dtype (pre-cast host-side); accumulate in f32.
    kv = jnp.dot(xe_ref[...], wkv_ref[...], preferred_element_type=jnp.float32)
    k = kv[:, :hp].reshape(bb, t_enc, hp).astype(mm_dtype)
    v = kv[:, hp:].reshape(bb, t_enc, hp).astype(mm_dtype)

    # Query projection; the 1/sqrt(H) scale is folded into W_q host-side.
    q = jnp.dot(xd_ref[...], wq_ref[...], preferred_element_type=jnp.float32)
    q = q.reshape(bb, t_dec, hp).astype(mm_dtype)

    # Logits: batched q @ k^T contracting the (padded) head dim directly —
    # no materialized transpose of k.  f32 accumulation.
    wei = lax.dot_general(
        q, k,
        dimension_numbers=(((2,), (2,)), ((0,), (0,))),
        preferred_element_type=jnp.float32,
    )                                                      # (bb, t_dec, t_enc)

    if mask_ref is not None:
        # masked_fill(mask == 0, -inf).  Fully-masked rows deliberately give
        # NaN after softmax, matching PyTorch masked_fill + softmax.
        wei = jnp.where(mask_ref[...] == 0, -jnp.inf, wei)

    # Numerically-stable softmax over T_enc, in f32.
    m = jnp.max(wei, axis=-1, keepdims=True)
    e = jnp.exp(wei - m)
    denom = jnp.sum(e, axis=-1, keepdims=True)
    p = e * pl.reciprocal(denom, approx=False)   # one EUP recip/row, no divide

    # TODO(synk): dropout(p=0.0) is the identity; non-zero dropout would need
    # pltpu.prng_seed + pltpu.stateful_bernoulli applied to `p` here.

    # out = p @ v (batched, contracting T_enc), bf16 operands / f32 accumulate.
    out = lax.dot_general(
        p.astype(mm_dtype), v,
        dimension_numbers=(((2,), (1,)), ((0,), (0,))),
        preferred_element_type=jnp.float32,
    )                                                      # (bb, t_dec, hp)
    o_ref[...] = out.reshape(bb * t_dec, hp).astype(o_ref.dtype)


def cross_attention_head(x_encode, x_decode, wk, wq, wv, mask=None, *,
                         batch_block=None, use_bf16_matmul=True):
    """Pallas implementation of CrossAttentionHead.forward.

    x_encode: (B, T_enc, E) f32
    x_decode: (B, T_dec, E) f32
    wk, wq, wv: (H, E) f32   (nn.Linear weights, bias=False)
    mask: optional (B, T_dec, T_enc) or (T_dec, T_enc); mask == 0 -> -inf.
    returns: (B, T_dec, H) f32
    """
    B, T_enc, E = x_encode.shape
    _, T_dec, _ = x_decode.shape
    H = wk.shape[0]
    Hp = _round_up(H, _LANE)            # lane-dense (padded) head dim
    scale = float(H) ** -0.5            # PyTorch uses k.shape[-1] == H

    mm_dtype = jnp.bfloat16 if use_bf16_matmul else jnp.float32

    # Static host-side weight prep: zero-pad the head dim to a lane multiple,
    # pre-transpose to (E, out), fuse W_k|W_v, fold the scale into W_q, and
    # pre-cast to the MXU operand dtype (no per-step weight casts in-kernel).
    def pad_head(w):
        return jnp.pad(w, ((0, Hp - H), (0, 0)))
    w_kv = jnp.concatenate([pad_head(wk), pad_head(wv)], axis=0).T  # (E, 2*Hp)
    w_q = (pad_head(wq) * scale).T                                  # (E, Hp)
    w_kv = w_kv.astype(mm_dtype)
    w_q = w_q.astype(mm_dtype)

    # Wrapper-side batch flattening (free XLA layout plumbing; avoids an
    # in-kernel relayout across the E<128 lane dim) + operand down-cast.
    xe2d = x_encode.reshape(B * T_enc, E).astype(mm_dtype)
    xd2d = x_decode.reshape(B * T_dec, E).astype(mm_dtype)

    has_mask = mask is not None
    if has_mask:
        mask = jnp.asarray(mask)
        if mask.ndim == 2:  # broadcastable (T_dec, T_enc) mask
            mask = jnp.broadcast_to(mask, (B, T_dec, T_enc))
        mask_i8 = (mask != 0).astype(jnp.int8)  # 4x less DMA than an f32 bias

    # Generation-aware VMEM budgeting: 64 MiB physical on v7x vs 128 MiB on
    # v5e/v6e.  Cap the per-step working set at 1/4 of physical VMEM and set
    # the scoped limit explicitly (v5e's 16 MiB default is too small).
    capacity = _vmem_capacity_bytes()
    budget = capacity // 4
    vmem_limit = min((capacity * 3) // 4, 100 * 1024 * 1024)

    if batch_block is None:
        batch_block = _pick_batch_block(B, T_enc, T_dec, E, Hp, mm_dtype,
                                        has_mask, budget)
    bb = batch_block
    assert B % bb == 0
    grid = (B // bb,)

    kernel = functools.partial(
        _xattn_kernel, bb=bb, t_enc=T_enc, t_dec=T_dec, hp=Hp,
        has_mask=has_mask, mm_dtype=mm_dtype)

    in_specs = [
        pl.BlockSpec((bb * T_enc, E), lambda b: (b, 0)),   # x_encode rows
        pl.BlockSpec((bb * T_dec, E), lambda b: (b, 0)),   # x_decode rows
    ]
    args = [xe2d, xd2d]
    if has_mask:
        in_specs.append(pl.BlockSpec((bb, T_dec, T_enc), lambda b: (b, 0, 0)))
        args.append(mask_i8)
    in_specs += [
        pl.BlockSpec((E, 2 * Hp), lambda b: (0, 0)),       # fused W_kv^T
        pl.BlockSpec((E, Hp), lambda b: (0, 0)),           # scaled W_q^T
    ]
    args += [w_kv, w_q]

    out2d = pl.pallas_call(
        kernel,
        out_shape=jax.ShapeDtypeStruct((B * T_dec, Hp), x_decode.dtype),
        grid_spec=pltpu.PrefetchScalarGridSpec(
            num_scalar_prefetch=0,
            grid=grid,
            in_specs=in_specs,
            out_specs=pl.BlockSpec((bb * T_dec, Hp), lambda b: (b, 0)),
        ),
        compiler_params=pltpu.CompilerParams(
            dimension_semantics=("parallel",),
            vmem_limit_bytes=vmem_limit),
    )(*args)

    # Strip the zero lane padding and restore the module's (B, T_dec, H) layout.
    return out2d.reshape(B, T_dec, Hp)[..., :H]


def reference_jax(x_encode, x_decode, wk, wq, wv, mask=None):
    k = x_encode @ wk.T
    q = x_decode @ wq.T
    wei = q @ jnp.swapaxes(k, -2, -1) * (k.shape[-1] ** -0.5)
    if mask is not None:
        wei = jnp.where(mask == 0, -jnp.inf, wei)
    wei = jax.nn.softmax(wei, axis=-1)
    v = x_encode @ wv.T
    return wei @ v


if __name__ == "__main__":
    # Small shapes consistent with the module: n_embd=10, head_size=32.
    B, T_enc, T_dec, E, H = 2, 16, 8, 10, 32

    key = jax.random.PRNGKey(0)
    k0, k1, k2, k3, k4, k5 = jax.random.split(key, 6)

    x_encode = jax.random.normal(k0, (B, T_enc, E), dtype=jnp.float32)
    x_decode = jax.random.normal(k1, (B, T_dec, E), dtype=jnp.float32)

    # Deterministic nn.Linear-style init: U(-1/sqrt(in), 1/sqrt(in)).
    bound = 1.0 / math.sqrt(E)
    wk = jax.random.uniform(k2, (H, E), jnp.float32, -bound, bound)
    wq = jax.random.uniform(k3, (H, E), jnp.float32, -bound, bound)
    wv = jax.random.uniform(k4, (H, E), jnp.float32, -bound, bound)

    # Mask keeping ~80% of (dec, enc) pairs; guarantee no fully-masked rows so
    # the test avoids the (intentional, PyTorch-matching) NaN rows.
    mask = (jax.random.uniform(k5, (B, T_dec, T_enc)) > 0.2).astype(jnp.int32)
    mask = mask.at[..., 0].set(1)

    ref = reference_jax(x_encode, x_decode, wk, wq, wv)
    ref_m = reference_jax(x_encode, x_decode, wk, wq, wv, mask=mask)

    # Exact-f32 MXU path: tight check (no-mask variant DMAs no mask at all).
    out = jax.block_until_ready(
        cross_attention_head(x_encode, x_decode, wk, wq, wv,
                             use_bf16_matmul=False))
    assert jnp.allclose(out, ref, atol=1e-4, rtol=1e-4), "f32 no-mask mismatch"

    out_m = jax.block_until_ready(
        cross_attention_head(x_encode, x_decode, wk, wq, wv, mask=mask,
                             use_bf16_matmul=False))
    assert jnp.allclose(out_m, ref_m, atol=1e-4, rtol=1e-4), "f32 masked mismatch"

    # Default bf16-operand MXU path (native on v5e/v6e/v7x): looser tolerance
    # since operands are rounded to bf16 (accumulation stays f32).
    out_bf = jax.block_until_ready(
        cross_attention_head(x_encode, x_decode, wk, wq, wv, mask=mask))
    assert jnp.allclose(out_bf, ref_m, atol=3e-2, rtol=3e-2), "bf16 masked mismatch"

    print("KERNEL_OK")
</pallas_src>

<mosaic_0001>
module attributes {stable_mosaic.version = 11 : i64} {
  func.func @_xattn_kernel(%arg0: i32, %arg1: memref<16x10xf32, #tpu.memory_space<vmem>>, %arg2: memref<8x10xf32, #tpu.memory_space<vmem>>, %arg3: memref<10x256xf32, #tpu.memory_space<vmem>>, %arg4: memref<10x128xf32, #tpu.memory_space<vmem>>, %arg5: memref<8x128xf32, #tpu.memory_space<vmem>>) attributes {dimension_semantics = [#tpu.dimension_semantics<parallel>], iteration_bounds = array<i64: 2>, scalar_prefetch = 0 : i64, scratch_operands = 0 : i64, tpu.core_type = #tpu.core_type<tc>, window_params = [{transform_indices = @transform_0, window_bounds = array<i64: 16, 10>}, {transform_indices = @transform_1, window_bounds = array<i64: 8, 10>}, {pipeline_mode = #tpu.pipeline_mode<synchronous>, transform_indices = @transform_2, window_bounds = array<i64: 10, 256>}, {pipeline_mode = #tpu.pipeline_mode<synchronous>, transform_indices = @transform_3, window_bounds = array<i64: 10, 128>}, {transform_indices = @transform_4, window_bounds = array<i64: 8, 128>}]} {
    %c0 = arith.constant 0 : index
    %c0_0 = arith.constant 0 : index
    %0 = vector.load %arg1[%c0, %c0_0] : memref<16x10xf32, #tpu.memory_space<vmem>>, vector<16x10xf32>
    %c0_1 = arith.constant 0 : index
    %c0_2 = arith.constant 0 : index
    %1 = vector.load %arg3[%c0_1, %c0_2] : memref<10x256xf32, #tpu.memory_space<vmem>>, vector<10x256xf32>
    %cst = arith.constant dense<0.000000e+00> : vector<16x256xf32>
    %2 = tpu.matmul %0, %1, %cst {dimension_numbers = #tpu.dot_dimension_numbers<[1], [0], [0], [1], [0, 0, 1, 1], [], []>} : vector<16x10xf32>, vector<10x256xf32>, vector<16x256xf32> -> vector<16x256xf32>
    %3 = vector.extract_strided_slice %2 {offsets = [0, 0], sizes = [16, 128], strides = [1, 1]} : vector<16x256xf32> to vector<16x128xf32>
    %4 = vector.shape_cast %3 : vector<16x128xf32> to vector<1x16x128xf32>
    %5 = vector.extract_strided_slice %2 {offsets = [0, 128], sizes = [16, 128], strides = [1, 1]} : vector<16x256xf32> to vector<16x128xf32>
    %6 = vector.shape_cast %5 : vector<16x128xf32> to vector<1x16x128xf32>
    %c0_3 = arith.constant 0 : index
    %c0_4 = arith.constant 0 : index
    %7 = vector.load %arg2[%c0_3, %c0_4] : memref<8x10xf32, #tpu.memory_space<vmem>>, vector<8x10xf32>
    %c0_5 = arith.constant 0 : index
    %c0_6 = arith.constant 0 : index
    %8 = vector.load %arg4[%c0_5, %c0_6] : memref<10x128xf32, #tpu.memory_space<vmem>>, vector<10x128xf32>
    %cst_7 = arith.constant dense<0.000000e+00> : vector<8x128xf32>
    %9 = tpu.matmul %7, %8, %cst_7 {dimension_numbers = #tpu.dot_dimension_numbers<[1], [0], [0], [1], [0, 0, 1, 1], [], []>} : vector<8x10xf32>, vector<10x128xf32>, vector<8x128xf32> -> vector<8x128xf32>
    %10 = vector.shape_cast %9 : vector<8x128xf32> to vector<1x8x128xf32>
    %cst_8 = arith.constant dense<0.000000e+00> : vector<1x8x16xf32>
    %11 = tpu.matmul %10, %4, %cst_8 {dimension_numbers = #tpu.dot_dimension_numbers<[2], [2], [1], [1], [0, 0, 0, 1, 1, 1], [0], [0]>} : vector<1x8x128xf32>, vector<1x16x128xf32>, vector<1x8x16xf32> -> vector<1x8x16xf32>
    %cst_9 = arith.constant dense<0xFF800000> : vector<1x8xf32>
    %12 = vector.multi_reduction <maximumf>, %11, %cst_9 [2] : vector<1x8x16xf32> to vector<1x8xf32>
    %13 = vector.shape_cast %12 : vector<1x8xf32> to vector<1x8x1xf32>
    %14 = vector.broadcast %13 : vector<1x8x1xf32> to vector<1x8x16xf32>
    %15 = arith.subf %11, %14 : vector<1x8x16xf32>
    %16 = math.exp %15 : vector<1x8x16xf32>
    %cst_10 = arith.constant dense<0.000000e+00> : vector<1x8xf32>
    %17 = vector.multi_reduction <add>, %16, %cst_10 [2] : vector<1x8x16xf32> to vector<1x8xf32>
    %18 = vector.shape_cast %17 : vector<1x8xf32> to vector<1x8x1xf32>
    %19 = tpu.reciprocal %18 : vector<1x8x1xf32> -> vector<1x8x1xf32>
    %20 = vector.broadcast %19 : vector<1x8x1xf32> to vector<1x8x16xf32>
    %21 = arith.mulf %16, %20 : vector<1x8x16xf32>
    %cst_11 = arith.constant dense<0.000000e+00> : vector<1x8x128xf32>
    %22 = tpu.matmul %21, %6, %cst_11 {dimension_numbers = #tpu.dot_dimension_numbers<[2], [1], [1], [2], [0, 0, 0, 1, 1, 2], [0], [0]>} : vector<1x8x16xf32>, vector<1x16x128xf32>, vector<1x8x128xf32> -> vector<1x8x128xf32>
    %23 = vector.shape_cast %22 : vector<1x8x128xf32> to vector<8x128xf32>
    %c0_12 = arith.constant 0 : index
    %c0_13 = arith.constant 0 : index
    %24 = vector.load %arg5[%c0_12, %c0_13] : memref<8x128xf32, #tpu.memory_space<vmem>>, vector<8x128xf32>
    tpu.vector_store %arg5[%c0_12, %c0_13], %23 {strides = array<i32>} : memref<8x128xf32, #tpu.memory_space<vmem>>, vector<8x128xf32>,
    return
  }
  func.func @transform_0(%arg0: i32) -> (i32, i32) {
    %c0_i32 = arith.constant 0 : i32
    %c0_i32_0 = arith.constant 0 : i32
    return %arg0, %c0_i32 : i32, i32
  }
  func.func @transform_1(%arg0: i32) -> (i32, i32) {
    %c0_i32 = arith.constant 0 : i32
    %c0_i32_0 = arith.constant 0 : i32
    return %arg0, %c0_i32 : i32, i32
  }
  func.func @transform_2(%arg0: i32) -> (i32, i32) {
    %c0_i32 = arith.constant 0 : i32
    %c0_i32_0 = arith.constant 0 : i32
    %c0_i32_1 = arith.constant 0 : i32
    return %c0_i32, %c0_i32_0 : i32, i32
  }
  func.func @transform_3(%arg0: i32) -> (i32, i32) {
    %c0_i32 = arith.constant 0 : i32
    %c0_i32_0 = arith.constant 0 : i32
    %c0_i32_1 = arith.constant 0 : i32
    return %c0_i32, %c0_i32_0 : i32, i32
  }
  func.func @transform_4(%arg0: i32) -> (i32, i32) {
    %c0_i32 = arith.constant 0 : i32
    %c0_i32_0 = arith.constant 0 : i32
    return %arg0, %c0_i32 : i32, i32
  }
}

</mosaic_0001>

<llo_original>
// kernel: tpu_custom_call.1
$region0: #{tpu_custom_call.1}
  #allocation0 [shape = 'u32[]', space=smem, size = 0x4, offset = 0x4, fixed_abs, tag = 'smem constant byte address 0x4 - core index']
  #allocation1 [shape = 'u32[72,128]{1,0:T(1,128)}', space=vmem, size = 0x9000, scoped, tag = 'internal scratch']
  %s0 = inlined_call_operand.vmem [shape: f32[32,10], index: 0, kind: input, shape index: {}]
  %s1 = inlined_call_operand.vmem [shape: f32[16,10], index: 1, kind: input, shape index: {}]
  %s2 = inlined_call_operand.vmem [shape: f32[10,256], index: 2, kind: input, shape index: {}]
  %s3 = inlined_call_operand.hbm [shape: f32[10,128], index: 3, kind: input, shape index: {}]
  %s4 = inlined_call_operand.hbm [shape: f32[16,128], index: 4, kind: output, shape index: {}]
  %s5 = sld [smem:[#allocation0]]
  $region53: #{tpu_custom_call.1} parent=0
    _
  %s7 = ssub.s32 1, %s5
  %s8 = scalar_select 0, %s7, %s5
  $region1: #{tpu_custom_call.1} parent=0
    #allocation2 [shape = 'u8[8192]{0}', space=vmem, size = 0x2000, scoped, tag = 'input window, operand 3, single buffered']
    #allocation3 [shape = 's32[2]{0}', space=sflag, size = 0x8, scoped, tag = 'scoped memory for tpu_custom_call.1']
    #allocation4 [shape = 's32[2]{0}', space=sflag, size = 0x8, scoped, tag = 'scoped memory for tpu_custom_call.1']
    #allocation5 [shape = 'u8[8192]{0}', space=vmem, size = 0x2000, scoped, tag = 'output window, operand 0']
    %9 = vsyncpa [#allocation3], 0
    %10 = vsyncpa [#allocation4], 0
    %s11 = scalar_lea.sflag [#allocation4], 1
    %12 = vsyncpa %s11, 0
    loop: start=0, step=1, limit=4
    $region2: #{tpu_custom_call.1} parent=1 // loop_pre_header
      _
    $region3: #{tpu_custom_call.1} parent=1 // loop_header
      %s14 = sphi 0, %s18
      %p15 = scmp.ge.s32.totalorder %s14, 4
      %s24 = sphi 0, %s26
      %s27 = sphi 0, %s24
      %s28 = sphi 0, %s27
      %s44 = sphi 0, %s28
      %s50 = sphi 0, %s52
      %s53 = sphi 0, %s50
      %s54 = sphi 0, %s53
      %s70 = sphi 0, %s54
      %s74 = sphi 0, %s74
      %s76 = sphi 0, %s74
      %s77 = sphi 0, %s76
      %s91 = sphi 0, %s77
      %s95 = sphi 0, %s95
      %s97 = sphi 0, %s95
      %s98 = sphi 0, %s97
      %s112 = sphi 0, %s98
      %s118 = sphi 0, %s120
      %s121 = sphi 0, %s118
      %s122 = sphi 0, %s121
      %s138 = sphi 0, %s122
    $region4: #{tpu_custom_call.1} parent=1 // loop_header_branch
      %17 = sbr.rel (%p15) target = $region8
    $region5: #{tpu_custom_call.1} parent=1 // loop_body
      %s19 = ssub.s32 %s14, 1
      %s20 = ssub.s32 %s14, 2
      %s21 = sadd.s32 %s14, 1
      %s22 = ssub.s32 %s14, %s21
      %p23 = scmp.eq.s32.totalorder %s22, 0
      %s25 = sadd.s32 %s24, 1
      %s26 = scalar_select %p23, %s24, %s25
      %p29 = pneg %p23
      %p30 = scmp.eq.s32.totalorder %s14, 1
      %p31 = por %p29, %p30
      %p32 = scmp.ne.s32.totalorder %s24, %s27
      %p33 = scmp.eq.s32.totalorder %s14, 0
      %p34 = por %p32, %p33
      %p35 = scmp.ne.s32.totalorder %s24, %s27
      %p36 = scmp.eq.s32.totalorder %s19, 1
      %p37 = por %p35, %p36
      %p38 = scmp.ne.s32.totalorder %s27, %s28
      %p39 = scmp.eq.s32.totalorder %s19, 0
      %p40 = por %p38, %p39
      %p41 = scmp.ne.s32.totalorder %s27, %s28
      %p42 = scmp.eq.s32.totalorder %s20, 1
      %p43 = por %p41, %p42
      %p45 = scmp.ne.s32.totalorder %s28, %s44
      %p46 = scmp.eq.s32.totalorder %s20, 0
      %p47 = por %p45, %p46
      %s48 = ssub.s32 %s14, %s21
      %p49 = scmp.eq.s32.totalorder %s48, 0
      %s51 = sadd.s32 %s50, 1
      %s52 = scalar_select %p49, %s50, %s51
      %p55 = pneg %p49
      %p56 = scmp.eq.s32.totalorder %s14, 1
      %p57 = por %p55, %p56
      %p58 = scmp.ne.s32.totalorder %s50, %s53
      %p59 = scmp.eq.s32.totalorder %s14, 0
      %p60 = por %p58, %p59
      %p61 = scmp.ne.s32.totalorder %s50, %s53
      %p62 = scmp.eq.s32.totalorder %s19, 1
      %p63 = por %p61, %p62
      %p64 = scmp.ne.s32.totalorder %s53, %s54
      %p65 = scmp.eq.s32.totalorder %s19, 0
      %p66 = por %p64, %p65
      %p67 = scmp.ne.s32.totalorder %s53, %s54
      %p68 = scmp.eq.s32.totalorder %s20, 1
      %p69 = por %p67, %p68
      %p71 = scmp.ne.s32.totalorder %s54, %s70
      %p72 = scmp.eq.s32.totalorder %s20, 0
      %p73 = por %p71, %p72
      %s75 = sadd.s32 %s74, 1
      %p78 = scmp.eq.s32.totalorder %s14, 1
      %p79 = scmp.ne.s32.totalorder %s74, %s76
      %p80 = scmp.eq.s32.totalorder %s14, 0
      %p81 = por %p79, %p80
      %p82 = scmp.ne.s32.totalorder %s74, %s76
      %p83 = scmp.eq.s32.totalorder %s19, 1
      %p84 = por %p82, %p83
      %p85 = scmp.ne.s32.totalorder %s76, %s77
      %p86 = scmp.eq.s32.totalorder %s19, 0
      %p87 = por %p85, %p86
      %p88 = scmp.ne.s32.totalorder %s76, %s77
      %p89 = scmp.eq.s32.totalorder %s20, 1
      %p90 = por %p88, %p89
      %p92 = scmp.ne.s32.totalorder %s77, %s91
      %p93 = scmp.eq.s32.totalorder %s20, 0
      %p94 = por %p92, %p93
      %s96 = sadd.s32 %s95, 1
      %p99 = scmp.eq.s32.totalorder %s14, 1
      %p100 = scmp.ne.s32.totalorder %s95, %s97
      %p101 = scmp.eq.s32.totalorder %s14, 0
      %p102 = por %p100, %p101
      %p103 = scmp.ne.s32.totalorder %s95, %s97
      %p104 = scmp.eq.s32.totalorder %s19, 1
      %p105 = por %p103, %p104
      %p106 = scmp.ne.s32.totalorder %s97, %s98
      %p107 = scmp.eq.s32.totalorder %s19, 0
      %p108 = por %p106, %p107
      %p109 = scmp.ne.s32.totalorder %s97, %s98
      %p110 = scmp.eq.s32.totalorder %s20, 1
      %p111 = por %p109, %p110
      %p113 = scmp.ne.s32.totalorder %s98, %s112
      %p114 = scmp.eq.s32.totalorder %s20, 0
      %p115 = por %p113, %p114
      %s116 = ssub.s32 %s14, %s21
      %p117 = scmp.eq.s32.totalorder %s116, 0
      %s119 = sadd.s32 %s118, 1
      %s120 = scalar_select %p117, %s118, %s119
      %p123 = pneg %p117
      %p124 = scmp.eq.s32.totalorder %s14, 1
      %p125 = por %p123, %p124
      %p126 = scmp.ne.s32.totalorder %s118, %s121
      %p127 = scmp.eq.s32.totalorder %s14, 0
      %p128 = por %p126, %p127
      %p129 = scmp.ne.s32.totalorder %s118, %s121
      %p130 = scmp.eq.s32.totalorder %s19, 1
      %p131 = por %p129, %p130
      %p132 = scmp.ne.s32.totalorder %s121, %s122
      %p133 = scmp.eq.s32.totalorder %s19, 0
      %p134 = por %p132, %p133
      %p135 = scmp.ne.s32.totalorder %s121, %s122
      %p136 = scmp.eq.s32.totalorder %s20, 1
      %p137 = por %p135, %p136
      %p139 = scmp.ne.s32.totalorder %s122, %s138
      %p140 = scmp.eq.s32.totalorder %s20, 0
      %p141 = por %p139, %p140
      %p142 = scmp.le.s32.totalorder 1, %s14
      %p143 = scmp.lt.s32.totalorder %s14, 3
      %p144 = pnand %p142, %p143
      %p145 = pneg %p144
      // Predicated region
      $region9: #{tpu_custom_call.1} parent=5 // pred_check
        _
      $region10: #{tpu_custom_call.1} parent=5 // pred_check_branch
        %147 = sbr.rel (%p144) target = $region12
      $region11: #{tpu_custom_call.1} parent=5 // pred_region
        %s148 = ssub.s32 %s14, 1
        // Predicated region
        $region13: #{tpu_custom_call.1} parent=11 // pred_check
          %p149 = pneg %p87
        $region14: #{tpu_custom_call.1} parent=11 // pred_check_branch
          %151 = sbr.rel (%p149) target = $region16
        $region15: #{tpu_custom_call.1} parent=11 // pred_region
          _
        $region16: #{tpu_custom_call.1} parent=11 // pred_fallthru
          _
        // Predicated region
        $region17: #{tpu_custom_call.1} parent=11 // pred_check
          %p152 = pneg %p108
        $region18: #{tpu_custom_call.1} parent=11 // pred_check_branch
          %154 = sbr.rel (%p152) target = $region20
        $region19: #{tpu_custom_call.1} parent=11 // pred_region
          %156 = vsyncadd [#allocation3], 0
          %s157 = sshll.u32 %s3, 4
          %s158 = int_to_ptr.hbm [resolvable:$true] %s157
          %s159 = sshll.u32 [#allocation2], 4
          %s160 = int_to_ptr.vmem [resolvable:$true] %s159
          %165 = dma.hbm_to_vmem [thread:$0]  %s158, 256, %s160, [#allocation3], 128, 128, 8
        $region20: #{tpu_custom_call.1} parent=11 // pred_fallthru
          _
      $region12: #{tpu_custom_call.1} parent=5 // pred_fallthru
        _
      %p166 = scmp.lt.s32.totalorder %s14, 2
      // Predicated region
      $region21: #{tpu_custom_call.1} parent=5 // pred_check
        %p167 = pneg %p166
      $region22: #{tpu_custom_call.1} parent=5 // pred_check_branch
        %169 = sbr.rel (%p167) target = $region24
      $region23: #{tpu_custom_call.1} parent=5 // pred_region
        // Predicated region
        $region25: #{tpu_custom_call.1} parent=23 // pred_check
          %p170 = pneg %p34
        $region26: #{tpu_custom_call.1} parent=23 // pred_check_branch
          %172 = sbr.rel (%p170) target = $region28
        $region27: #{tpu_custom_call.1} parent=23 // pred_region
          %s173 = smul.u32 2, %s14
          %p174 = scmp.lt.s32.totalorder %s173, 3
          %s175 = scalar_select %p174, %s173, 3
          %s176 = smul.addr %s175, 8
          %s177 = scalar_lea.vmem %s0, %s176
          %s178 = smul.u32 2, %s14
        $region28: #{tpu_custom_call.1} parent=23 // pred_fallthru
          _
        // Predicated region
        $region29: #{tpu_custom_call.1} parent=23 // pred_check
          %p179 = pneg %p60
        $region30: #{tpu_custom_call.1} parent=23 // pred_check_branch
          %181 = sbr.rel (%p179) target = $region32
        $region31: #{tpu_custom_call.1} parent=23 // pred_region
          %p182 = scmp.lt.s32.totalorder %s14, 1
          %s183 = scalar_select %p182, %s14, 1
          %s184 = smul.addr %s183, 8
          %s185 = scalar_lea.vmem %s1, %s184
        $region32: #{tpu_custom_call.1} parent=23 // pred_fallthru
          _
      $region24: #{tpu_custom_call.1} parent=5 // pred_fallthru
        _
      %p186 = scmp.le.s32.totalorder 1, %s14
      %p187 = scmp.lt.s32.totalorder %s14, 3
      %p188 = pnand %p186, %p187
      %p189 = pneg %p188
      // Predicated region
      $region33: #{tpu_custom_call.1} parent=5 // pred_check
        _
      $region34: #{tpu_custom_call.1} parent=5 // pred_check_branch
        %191 = sbr.rel (%p188) target = $region36
      $region35: #{tpu_custom_call.1} parent=5 // pred_region
        %s192 = ssub.s32 %s14, 1
        // Predicated region
        $region37: #{tpu_custom_call.1} parent=35 // pred_check
          %p193 = pneg %p108
        $region38: #{tpu_custom_call.1} parent=35 // pred_check_branch
          %195 = sbr.rel (%p193) target = $region40
        $region39: #{tpu_custom_call.1} parent=35 // pred_region
          %197 = dma.done [#allocation3], 256
        $region40: #{tpu_custom_call.1} parent=35 // pred_fallthru
          _
        %s198 = smul.u32 2, %s19
        %p199 = scmp.lt.s32.totalorder %s198, 3
        %s200 = scalar_select %p199, %s198, 3
        %s201 = smul.addr %s200, 8
        %s202 = scalar_lea.vmem %s0, %s201
        %p203 = pneg %p40
        %p204 = pneg %p37
        %p205 = scmp.lt.s32.totalorder %s19, 1
        %s206 = scalar_select %p205, %s19, 1
        %s207 = smul.addr %s206, 8
        %s208 = scalar_lea.vmem %s1, %s207
        %p209 = pneg %p66
        %p210 = pneg %p63
        %p211 = pneg %p87
        %p212 = pneg %p84
        %p213 = pneg %p108
        %p214 = pneg %p105
        %p215 = pneg %p134
        %p216 = pneg %p131
        %s217 = sand.u32 %s121, 1
        %s218 = scalar_lea.sflag [#allocation4], %s217
        %s219 = sand.u32 %s121, 1
        %s220 = smul.addr %s219, 8
        %s221 = scalar_lea.vmem [#allocation5], %s220
        %s222 = smul.u32 2, %s19
        %p223 = scmp.lt.s32.totalorder %s222, 3
        %s224 = scalar_select %p223, %s222, 3
        %s225 = smul.addr %s224, 8
        %s226 = scalar_lea.vmem %s0, %s225
        %s227 = smul.u32 2, %s19
        %p228 = scmp.lt.s32.totalorder %s19, 1
        %s229 = scalar_select %p228, %s19, 1
        %s230 = smul.addr %s229, 8
        %s231 = scalar_lea.vmem %s1, %s230
        %v232 = vld [vmem:[%s226] sm:$0xff]
        %v233 = vld [vmem:[%s226 + $0x8] sm:$0xff]
        %v234 = vld [vmem:[%s2] sm:$0xff]
        %v235 = vld [vmem:[%s2 + $0x8] sm:$0xff]
        %v236 = vld [vmem:[%s2 + $0x10] sm:$0x3]
        %v237 = vld [vmem:[%s2 + $0x18] sm:$0x3]
        %vm238 = vcmask 80896
        %v240 = vsel %vm238, %v232, 0
        %v243 = vsel %vm238, %v233, 0
        %vm245 = vcmask 1041408
        %v247 = vsel %vm245, %v236, 0
        %v250 = vsel %vm245, %v237, 0
        %252 = vmatpush.msra.mxu0 0.0
        %253 = vmatpush.msra.mxu0 0.0
        %254 = vmatpush.msra.mxu0 0.0
        %255 = vmatpush.msra.mxu0 0.0
        %256 = vmatpush.msra.mxu0 0.0
        %257 = vmatpush.msra.mxu0 0.0
        %258 = vmatpush.msra.mxu0 0.0
        %259 = vmatpush.msra.mxu0 0.0
        %260 = vmatpush.msra.mxu0 0.0
        %261 = vmatpush.msra.mxu0 0.0
        %262 = vmatpush.msra.mxu0 0.0
        %263 = vmatpush.msra.mxu0 0.0
        %264 = vmatpush.msra.mxu0 0.0
        %265 = vmatpush.msra.mxu0 0.0
        %266 = vmatpush.msra.mxu0 %v247
        %267 = vmatpush.msra.mxu0 %v234
        %268 = vmatmul.f32.gmra.mxu0 %v240
        %v269 = vpop.f32.mrf.mxu0
        %v270 = vadd.f32 0.0, %v269
        %271 = vmatmul.f32.gmra.mxu0 %v243
        %v272 = vpop.f32.mrf.mxu0
        %v273 = vadd.f32 0.0, %v272
        %274 = vdwg.mxu0
        %275 = vmatpush.msra.mxu0 0.0
        %276 = vmatpush.msra.mxu0 0.0
        %277 = vmatpush.msra.mxu0 0.0
        %278 = vmatpush.msra.mxu0 0.0
        %279 = vmatpush.msra.mxu0 0.0
        %280 = vmatpush.msra.mxu0 0.0
        %281 = vmatpush.msra.mxu0 0.0
        %282 = vmatpush.msra.mxu0 0.0
        %283 = vmatpush.msra.mxu0 0.0
        %284 = vmatpush.msra.mxu0 0.0
        %285 = vmatpush.msra.mxu0 0.0
        %286 = vmatpush.msra.mxu0 0.0
        %287 = vmatpush.msra.mxu0 0.0
        %288 = vmatpush.msra.mxu0 0.0
        %289 = vmatpush.msra.mxu0 %v250
        %290 = vmatpush.msra.mxu0 %v235
        %291 = vmatmul.f32.gmra.mxu0 %v240
        %v292 = vpop.f32.mrf.mxu0
        %v293 = vadd.f32 0.0, %v292
        %294 = vmatmul.f32.gmra.mxu0 %v243
        %v295 = vpop.f32.mrf.mxu0
        %v296 = vadd.f32 0.0, %v295
        %297 = vdwg.mxu0
        %v298 = vld [vmem:[%s231] sm:$0xff]
        %v299 = vld [vmem:[#allocation2] sm:$0xff]
        %v300 = vld [vmem:[#allocation2 + $0x8] sm:$0x3]
        %v302 = vsel %vm238, %v298, 0
        %v305 = vsel %vm245, %v300, 0
        %307 = vmatpush.msra.mxu0 0.0
        %308 = vmatpush.msra.mxu0 0.0
        %309 = vmatpush.msra.mxu0 0.0
        %310 = vmatpush.msra.mxu0 0.0
        %311 = vmatpush.msra.mxu0 0.0
        %312 = vmatpush.msra.mxu0 0.0
        %313 = vmatpush.msra.mxu0 0.0
        %314 = vmatpush.msra.mxu0 0.0
        %315 = vmatpush.msra.mxu0 0.0
        %316 = vmatpush.msra.mxu0 0.0
        %317 = vmatpush.msra.mxu0 0.0
        %318 = vmatpush.msra.mxu0 0.0
        %319 = vmatpush.msra.mxu0 0.0
        %320 = vmatpush.msra.mxu0 0.0
        %321 = vmatpush.msra.mxu0 %v305
        %322 = vmatpush.msra.mxu0 %v299
        %323 = vmatmul.f32.gmra.mxu0 %v302
        %v324 = vpop.f32.mrf.mxu0
        %v325 = vadd.f32 0.0, %v324
        %326 = vdwg.mxu0
        %327 = vmatpush.xpose.msra.mxu0 0.0
        %328 = vmatpush.xpose.msra.mxu0 0.0
        %329 = vmatpush.xpose.msra.mxu0 0.0
        %330 = vmatpush.xpose.msra.mxu0 0.0
        %331 = vmatpush.xpose.msra.mxu0 0.0
        %332 = vmatpush.xpose.msra.mxu0 0.0
        %333 = vmatpush.xpose.msra.mxu0 0.0
        %334 = vmatpush.xpose.msra.mxu0 0.0
        %335 = vmatpush.xpose.msra.mxu0 0.0
        %336 = vmatpush.xpose.msra.mxu0 0.0
        %337 = vmatpush.xpose.msra.mxu0 0.0
        %338 = vmatpush.xpose.msra.mxu0 0.0
        %339 = vmatpush.xpose.msra.mxu0 0.0
        %340 = vmatpush.xpose.msra.mxu0 0.0
        %341 = vmatpush.xpose.msra.mxu0 %v273
        %342 = vmatpush.xpose.msra.mxu0 %v270
        %343 = vmatmul.f32.gmra.mxu0 %v325
        %v344 = vpop.f32.mrf.mxu0
        %v345 = vadd.f32 0.0, %v344
        %346 = vdwg.mxu0
        %vm347 = vcmask 130048
        %v348 = vsel %vm347, %v345, -inf
        %349 = vmax.xlane.f32.xlu0 %v348
        %v350 = vpop.xlane.xlu0 %349
        %v351 = vsub.f32 %v345, %v350
        %v352 = vmul.f32 %v351, 1.442695
        %v353 = vpow.pop %v352
        %v354 = vsel %vm347, %v353, 0.0
        %355 = vadd.xlane.f32.xlu0 %v354
        %v356 = vpop.xlane.xlu0 %355
        %v357 = vrcp.pop %v356
        %v358 = vmul.f32 %v356, %v357
        %v359 = vsub.f32 1.0, %v358
        %v360 = vmul.f32 %v357, %v359
        %v361 = vadd.f32 %v357, %v360
        %vm362 = vweird.f32 %v356
        %vm363 = vweird.f32 %v357
        %vm364 = vmor %vm362, %vm363
        %v365 = vsel %vm364, %v357, %v361
        %v366 = vand.u32 2147483647, %v356
        %vm367 = vcmp.eq.f32.partialorder %v366, 8.507059e+37
        %v368 = vand.u32 %v356, 2147483648
        %v369 = vor.u32 1.1754944e-38, %v368
        %v370 = vsel %vm367, %v369, %v365
        %v371 = vmul.f32 %v353, %v370
        %v373 = vsel %vm347, %v371, 0
        %375 = vmatpush.msra.mxu0 0.0
        %376 = vmatpush.msra.mxu0 0.0
        %377 = vmatpush.msra.mxu0 0.0
        %378 = vmatpush.msra.mxu0 0.0
        %379 = vmatpush.msra.mxu0 0.0
        %380 = vmatpush.msra.mxu0 0.0
        %381 = vmatpush.msra.mxu0 0.0
        %382 = vmatpush.msra.mxu0 0.0
        %383 = vmatpush.msra.mxu0 0.0
        %384 = vmatpush.msra.mxu0 0.0
        %385 = vmatpush.msra.mxu0 0.0
        %386 = vmatpush.msra.mxu0 0.0
        %387 = vmatpush.msra.mxu0 0.0
        %388 = vmatpush.msra.mxu0 0.0
        %389 = vmatpush.msra.mxu0 %v296
        %390 = vmatpush.msra.mxu0 %v293
        %391 = vmatmul.f32.gmra.mxu0 %v373
        %v392 = vpop.f32.mrf.mxu0
        %v393 = vadd.f32 0.0, %v392
        %394 = vdwg.mxu0
        %395 = vst [vmem:[%s221] sm:$0xff] %v393
        %s396 = sand.u32 %s121, 1
        %s397 = scalar_lea.sflag [#allocation4], %s396
        %s398 = sand.u32 %s121, 1
        %s399 = smul.addr %s398, 8
        %s400 = scalar_lea.vmem [#allocation5], %s399
        // Predicated region
        $region41: #{tpu_custom_call.1} parent=35 // pred_check
          %p401 = pneg %p131
        $region42: #{tpu_custom_call.1} parent=35 // pred_check_branch
          %403 = sbr.rel (%p401) target = $region44
        $region43: #{tpu_custom_call.1} parent=35 // pred_region
          %405 = vsyncadd %s397, 0
          %s406 = smul.addr %s19, 8
          %s407 = scalar_lea.hbm %s4, %s406
          %s409 = sshll.u32 %s400, 4
          %s410 = int_to_ptr.vmem [resolvable:$true] %s409
          %s411 = sshll.u32 %s407, 4
          %s412 = int_to_ptr.hbm [resolvable:$true] %s411
          %414 = dma.vmem_to_hbm [thread:$0]  %s410, 128, %s412, %s397
        $region44: #{tpu_custom_call.1} parent=35 // pred_fallthru
          _
      $region36: #{tpu_custom_call.1} parent=5 // pred_fallthru
        _
      %p415 = scmp.le.s32.totalorder 2, %s14
      // Predicated region
      $region45: #{tpu_custom_call.1} parent=5 // pred_check
        %p416 = pneg %p415
      $region46: #{tpu_custom_call.1} parent=5 // pred_check_branch
        %418 = sbr.rel (%p416) target = $region48
      $region47: #{tpu_custom_call.1} parent=5 // pred_region
        %s419 = ssub.s32 %s14, 2
        // Predicated region
        $region49: #{tpu_custom_call.1} parent=47 // pred_check
          %p420 = pneg %p137
        $region50: #{tpu_custom_call.1} parent=47 // pred_check_branch
          %422 = sbr.rel (%p420) target = $region52
        $region51: #{tpu_custom_call.1} parent=47 // pred_region
          %s423 = sand.u32 %s122, 1
          %s424 = scalar_lea.sflag [#allocation4], %s423
          %s425 = sand.u32 %s122, 1
          %s426 = smul.addr %s425, 8
          %s427 = scalar_lea.vmem [#allocation5], %s426
          %429 = dma.done %s424, 128
        $region52: #{tpu_custom_call.1} parent=47 // pred_fallthru
          _
      $region48: #{tpu_custom_call.1} parent=5 // pred_fallthru
        _
    $region6: #{tpu_custom_call.1} parent=1 // loop_footer
      %s18 = sadd.s32 1, %s14
    $region7: #{tpu_custom_call.1} parent=1 // loop_footer_branch
      %13 = sbr.rel target = $region3
    $region8: #{tpu_custom_call.1} parent=1 // loop_exit
      _
    %430 = vsyncpa [#allocation3], 1
    %s431 = scalar_lea.sflag [#allocation3], 1
    %432 = vsyncpa %s431, 1
    %433 = vsyncpa [#allocation4], 1
    %s434 = scalar_lea.sflag [#allocation4], 1
    %435 = vsyncpa %s434, 1

</llo_original>
